<compile_context>
chip_gen: v7x
topology: tpu7x:2x2x1
jax: 0.10.0
libtpu: 0.0.40
codegen_flags: <defaults>
</compile_context>

<pallas_src>
import math

import jax
import jax.numpy as jnp
from jax.experimental import pallas as pl
from jax.experimental.pallas import tpu as pltpu


def conv2_kernel(x_ref, cg_ref, cv_ref, wag_ref, wav_ref, wbg_ref, wbv_ref,
                 o_ref):
    """Processes B batch elements per grid step.

    x_ref:   (B, L+1, 2*C_in)  time-step pairs of x (compute dtype, e.g. bf16)
    cg_ref:  (B, 1, C_out)     conv bias + global cond, gate half   (f32)
    cv_ref:  (B, 1, C_out)     conv bias + global cond, value half  (f32)
    wag/wav: (2*C_in, C_out)   taps {0,1} stacked along K; gate / value halves
    wbg/wbv: (2*C_in, C_out)   taps {2,3} stacked along K; gate / value halves
    o_ref:   (B, L, C_out)
    """
    B = x_ref.shape[0]
    L = o_ref.shape[1]

    wag = wag_ref[...]
    wav = wav_ref[...]
    wbg = wbg_ref[...]
    wbv = wbv_ref[...]

    for b in range(B):                      # static unroll; weights stay resident
        xb = x_ref[b]                       # (L+1, 2*C_in)
        # Full-length products, shift-by-one applied on the narrow result side.
        pg = jnp.dot(xb, wag, preferred_element_type=jnp.float32)   # (L+1, C_out)
        pv = jnp.dot(xb, wav, preferred_element_type=jnp.float32)
        qg = jnp.dot(xb, wbg, preferred_element_type=jnp.float32)
        qv = jnp.dot(xb, wbv, preferred_element_type=jnp.float32)

        acc_g = pg[:L] + qg[1:] + cg_ref[b]                          # (L, C_out)
        acc_v = pv[:L] + qv[1:] + cv_ref[b]
        o_ref[b] = (jax.nn.sigmoid(acc_g) * jnp.tanh(acc_v)).astype(o_ref.dtype)


def _pick_batch_block(n, cap=8):
    """Largest divisor of n that is <= cap (keeps the grid exact)."""
    for b in range(min(n, cap), 0, -1):
        if n % b == 0:
            return b
    return 1


def conv2_forward(x, global_cond, conv_w, conv_b, wcond_w, *,
                  batch_block=None, compute_dtype=jnp.bfloat16):
    """x: (N, 2L+2, C_in), global_cond: (N, Gc) or None
       conv_w: (2*C_out, C_in, 4)  [PyTorch Conv1d layout]
       conv_b: (2*C_out,)
       wcond_w: (2*C_out, Gc)      [PyTorch Linear layout, bias=False] or None
       returns y: (N, L, C_out)
    """
    N, T, c_in = x.shape
    L = (T - 4) // 2 + 1                    # T = 2L + 2
    two_co = conv_w.shape[0]
    c_out = two_co // 2

    # --- fold the stride-2 structure into channels: (N, L+1, 2*C_in), free reshape
    x_pairs = x.reshape(N, T // 2, 2 * c_in).astype(compute_dtype)

    # --- stack conv taps:  out[t] = pair[t] @ W_A + pair[t+1] @ W_B
    #     W_k = conv_w[:, :, k]  (2*C_out, C_in);  W_A = [W_0^T ; W_1^T], W_B = [W_2^T ; W_3^T]
    w_t = jnp.transpose(conv_w, (2, 1, 0))              # (4, C_in, 2*C_out)
    w_a = jnp.concatenate([w_t[0], w_t[1]], axis=0)     # (2*C_in, 2*C_out)
    w_b = jnp.concatenate([w_t[2], w_t[3]], axis=0)
    # split gate / value halves on the weight side (lane-aligned accumulators)
    wag = w_a[:, :c_out].astype(compute_dtype)
    wav = w_a[:, c_out:].astype(compute_dtype)
    wbg = w_b[:, :c_out].astype(compute_dtype)
    wbv = w_b[:, c_out:].astype(compute_dtype)

    # --- hoist the M=1 conditioning GEMM + bias out of the kernel (plain XLA)
    if global_cond is not None and wcond_w is not None:
        cond = global_cond.astype(jnp.float32) @ wcond_w.T.astype(jnp.float32)
        cond = cond + conv_b.astype(jnp.float32)                     # (N, 2*C_out)
    else:
        cond = jnp.broadcast_to(conv_b.astype(jnp.float32), (N, two_co))
    cond_g = cond[:, :c_out].reshape(N, 1, c_out)
    cond_v = cond[:, c_out:].reshape(N, 1, c_out)

    B = batch_block if batch_block is not None else _pick_batch_block(N)

    return pl.pallas_call(
        conv2_kernel,
        out_shape=jax.ShapeDtypeStruct((N, L, c_out), x.dtype),
        grid_spec=pltpu.PrefetchScalarGridSpec(
            num_scalar_prefetch=0,
            grid=(N // B,),
            in_specs=[
                pl.BlockSpec((B, T // 2, 2 * c_in), lambda n: (n, 0, 0)),
                pl.BlockSpec((B, 1, c_out), lambda n: (n, 0, 0)),
                pl.BlockSpec((B, 1, c_out), lambda n: (n, 0, 0)),
                pl.BlockSpec((2 * c_in, c_out), lambda n: (0, 0)),
                pl.BlockSpec((2 * c_in, c_out), lambda n: (0, 0)),
                pl.BlockSpec((2 * c_in, c_out), lambda n: (0, 0)),
                pl.BlockSpec((2 * c_in, c_out), lambda n: (0, 0)),
            ],
            out_specs=pl.BlockSpec((B, L, c_out), lambda n: (n, 0, 0)),
        ),
        compiler_params=pltpu.CompilerParams(
            dimension_semantics=("parallel",),
            vmem_limit_bytes=64 * 1024 * 1024,
        ),
    )(x_pairs, cond_g, cond_v, wag, wav, wbg, wbv)


def conv2_ref(x, global_cond, conv_w, conv_b, wcond_w):
    """Pure-JAX reference mirroring the PyTorch forward."""
    N, T, c_in = x.shape
    L = (T - 4) // 2 + 1
    two_co = conv_w.shape[0]
    c_out = two_co // 2
    x1 = jnp.zeros((N, L, two_co), jnp.float32)
    for k in range(4):
        x1 = x1 + jnp.einsum("ntc,oc->nto", x[:, k:k + 2 * L:2, :], conv_w[:, :, k])
    x1 = x1 + conv_b
    x2 = global_cond @ wcond_w.T
    y = x1 + x2[:, None, :]
    a, b = y[..., :c_out], y[..., c_out:]
    return jax.nn.sigmoid(a) * jnp.tanh(b)


if __name__ == "__main__":
    key = jax.random.PRNGKey(0)
    N, L, c_in, c_out, gc = 2, 8, 4, 8, 6
    T = 2 * L + 2
    ksz = 4

    k1, k2, k3, k4 = jax.random.split(key, 4)
    x = jax.random.normal(k1, (N, T, c_in), dtype=jnp.float32)
    global_cond = jax.random.normal(k2, (N, gc), dtype=jnp.float32)

    # deterministic parameter init (matching the module's __init__ scheme)
    wsize = 2.967 / math.sqrt(ksz * c_in)
    conv_w = jax.random.uniform(k3, (2 * c_out, c_in, ksz), jnp.float32,
                                minval=-wsize, maxval=wsize)
    conv_b = jnp.zeros((2 * c_out,), jnp.float32)          # bias zeroed in __init__
    lim = 1.0 / math.sqrt(gc)
    wcond_w = jax.random.uniform(k4, (2 * c_out, gc), jnp.float32,
                                 minval=-lim, maxval=lim)   # Linear(bias=False)

    y = conv2_forward(x, global_cond, conv_w, conv_b, wcond_w)
    y = jax.block_until_ready(y)
    assert y.shape == (N, L, c_out)

    # Reference on the same bf16-rounded matmul operands (cond/bias stay f32),
    # so only accumulation-order differences remain.
    x_q = x.astype(jnp.bfloat16).astype(jnp.float32)
    conv_w_q = conv_w.astype(jnp.bfloat16).astype(jnp.float32)
    y_ref = conv2_ref(x_q, global_cond, conv_w_q, conv_b, wcond_w)
    assert jnp.allclose(y, y_ref, atol=1e-3, rtol=1e-3)
    print("KERNEL_OK")
</pallas_src>

<mosaic_0001>
module attributes {stable_mosaic.version = 11 : i64} {
  func.func @conv2_kernel(%arg0: i32, %arg1: memref<2x9x8xbf16, #tpu.memory_space<vmem>>, %arg2: memref<2x1x8xf32, #tpu.memory_space<vmem>>, %arg3: memref<2x1x8xf32, #tpu.memory_space<vmem>>, %arg4: memref<8x8xbf16, #tpu.memory_space<vmem>>, %arg5: memref<8x8xbf16, #tpu.memory_space<vmem>>, %arg6: memref<8x8xbf16, #tpu.memory_space<vmem>>, %arg7: memref<8x8xbf16, #tpu.memory_space<vmem>>, %arg8: memref<2x8x8xf32, #tpu.memory_space<vmem>>) attributes {dimension_semantics = [#tpu.dimension_semantics<parallel>], iteration_bounds = array<i64: 1>, scalar_prefetch = 0 : i64, scratch_operands = 0 : i64, tpu.core_type = #tpu.core_type<tc>, window_params = [{transform_indices = @transform_0, window_bounds = array<i64: 2, 9, 8>}, {transform_indices = @transform_1, window_bounds = array<i64: 2, 1, 8>}, {transform_indices = @transform_2, window_bounds = array<i64: 2, 1, 8>}, {pipeline_mode = #tpu.pipeline_mode<synchronous>, transform_indices = @transform_3, window_bounds = array<i64: 8, 8>}, {pipeline_mode = #tpu.pipeline_mode<synchronous>, transform_indices = @transform_4, window_bounds = array<i64: 8, 8>}, {pipeline_mode = #tpu.pipeline_mode<synchronous>, transform_indices = @transform_5, window_bounds = array<i64: 8, 8>}, {pipeline_mode = #tpu.pipeline_mode<synchronous>, transform_indices = @transform_6, window_bounds = array<i64: 8, 8>}, {transform_indices = @transform_7, window_bounds = array<i64: 2, 8, 8>}]} {
    %c0 = arith.constant 0 : index
    %c0_0 = arith.constant 0 : index
    %0 = vector.load %arg4[%c0, %c0_0] : memref<8x8xbf16, #tpu.memory_space<vmem>>, vector<8x8xbf16>
    %c0_1 = arith.constant 0 : index
    %c0_2 = arith.constant 0 : index
    %1 = vector.load %arg5[%c0_1, %c0_2] : memref<8x8xbf16, #tpu.memory_space<vmem>>, vector<8x8xbf16>
    %c0_3 = arith.constant 0 : index
    %c0_4 = arith.constant 0 : index
    %2 = vector.load %arg6[%c0_3, %c0_4] : memref<8x8xbf16, #tpu.memory_space<vmem>>, vector<8x8xbf16>
    %c0_5 = arith.constant 0 : index
    %c0_6 = arith.constant 0 : index
    %3 = vector.load %arg7[%c0_5, %c0_6] : memref<8x8xbf16, #tpu.memory_space<vmem>>, vector<8x8xbf16>
    %c0_7 = arith.constant 0 : index
    %c0_8 = arith.constant 0 : index
    %c0_9 = arith.constant 0 : index
    %4 = vector.load %arg1[%c0_7, %c0_8, %c0_9] : memref<2x9x8xbf16, #tpu.memory_space<vmem>>, vector<1x9x8xbf16>
    %5 = vector.shape_cast %4 : vector<1x9x8xbf16> to vector<9x8xbf16>
    %cst = arith.constant dense<0.000000e+00> : vector<9x8xf32>
    %6 = tpu.matmul %5, %0, %cst {dimension_numbers = #tpu.dot_dimension_numbers<[1], [0], [0], [1], [0, 0, 1, 1], [], []>} : vector<9x8xbf16>, vector<8x8xbf16>, vector<9x8xf32> -> vector<9x8xf32>
    %cst_10 = arith.constant dense<0.000000e+00> : vector<9x8xf32>
    %7 = tpu.matmul %5, %1, %cst_10 {dimension_numbers = #tpu.dot_dimension_numbers<[1], [0], [0], [1], [0, 0, 1, 1], [], []>} : vector<9x8xbf16>, vector<8x8xbf16>, vector<9x8xf32> -> vector<9x8xf32>
    %cst_11 = arith.constant dense<0.000000e+00> : vector<9x8xf32>
    %8 = tpu.matmul %5, %2, %cst_11 {dimension_numbers = #tpu.dot_dimension_numbers<[1], [0], [0], [1], [0, 0, 1, 1], [], []>} : vector<9x8xbf16>, vector<8x8xbf16>, vector<9x8xf32> -> vector<9x8xf32>
    %cst_12 = arith.constant dense<0.000000e+00> : vector<9x8xf32>
    %9 = tpu.matmul %5, %3, %cst_12 {dimension_numbers = #tpu.dot_dimension_numbers<[1], [0], [0], [1], [0, 0, 1, 1], [], []>} : vector<9x8xbf16>, vector<8x8xbf16>, vector<9x8xf32> -> vector<9x8xf32>
    %10 = vector.extract_strided_slice %6 {offsets = [0, 0], sizes = [8, 8], strides = [1, 1]} : vector<9x8xf32> to vector<8x8xf32>
    %11 = vector.extract_strided_slice %8 {offsets = [1, 0], sizes = [8, 8], strides = [1, 1]} : vector<9x8xf32> to vector<8x8xf32>
    %12 = arith.addf %10, %11 : vector<8x8xf32>
    %c0_13 = arith.constant 0 : index
    %c0_14 = arith.constant 0 : index
    %c0_15 = arith.constant 0 : index
    %13 = vector.load %arg2[%c0_13, %c0_14, %c0_15] : memref<2x1x8xf32, #tpu.memory_space<vmem>>, vector<1x1x8xf32>
    %14 = vector.shape_cast %13 : vector<1x1x8xf32> to vector<1x8xf32>
    %15 = vector.broadcast %14 : vector<1x8xf32> to vector<8x8xf32>
    %16 = arith.addf %12, %15 : vector<8x8xf32>
    %17 = vector.extract_strided_slice %7 {offsets = [0, 0], sizes = [8, 8], strides = [1, 1]} : vector<9x8xf32> to vector<8x8xf32>
    %18 = vector.extract_strided_slice %9 {offsets = [1, 0], sizes = [8, 8], strides = [1, 1]} : vector<9x8xf32> to vector<8x8xf32>
    %19 = arith.addf %17, %18 : vector<8x8xf32>
    %c0_16 = arith.constant 0 : index
    %c0_17 = arith.constant 0 : index
    %c0_18 = arith.constant 0 : index
    %20 = vector.load %arg3[%c0_16, %c0_17, %c0_18] : memref<2x1x8xf32, #tpu.memory_space<vmem>>, vector<1x1x8xf32>
    %21 = vector.shape_cast %20 : vector<1x1x8xf32> to vector<1x8xf32>
    %22 = vector.broadcast %21 : vector<1x8xf32> to vector<8x8xf32>
    %23 = arith.addf %19, %22 : vector<8x8xf32>
    %24 = arith.negf %16 : vector<8x8xf32>
    %25 = math.exp %24 : vector<8x8xf32>
    %cst_19 = arith.constant 1.000000e+00 : f32
    %26 = vector.broadcast %cst_19 : f32 to vector<8x8xf32>
    %27 = arith.addf %26, %25 : vector<8x8xf32>
    %28 = arith.divf %26, %27 : vector<8x8xf32>
    %29 = math.tanh %23 : vector<8x8xf32>
    %30 = arith.mulf %28, %29 : vector<8x8xf32>
    %c0_20 = arith.constant 0 : index
    %c0_21 = arith.constant 0 : index
    %c0_22 = arith.constant 0 : index
    %31 = vector.load %arg8[%c0_20, %c0_21, %c0_22] : memref<2x8x8xf32, #tpu.memory_space<vmem>>, vector<1x8x8xf32>
    %32 = vector.shape_cast %31 : vector<1x8x8xf32> to vector<8x8xf32>
    %33 = vector.shape_cast %30 : vector<8x8xf32> to vector<1x8x8xf32>
    tpu.vector_store %arg8[%c0_20, %c0_21, %c0_22], %33 {strides = array<i32>} : memref<2x8x8xf32, #tpu.memory_space<vmem>>, vector<1x8x8xf32>,
    %c1 = arith.constant 1 : index
    %c0_23 = arith.constant 0 : index
    %c0_24 = arith.constant 0 : index
    %34 = vector.load %arg1[%c1, %c0_23, %c0_24] : memref<2x9x8xbf16, #tpu.memory_space<vmem>>, vector<1x9x8xbf16>
    %35 = vector.shape_cast %34 : vector<1x9x8xbf16> to vector<9x8xbf16>
    %cst_25 = arith.constant dense<0.000000e+00> : vector<9x8xf32>
    %36 = tpu.matmul %35, %0, %cst_25 {dimension_numbers = #tpu.dot_dimension_numbers<[1], [0], [0], [1], [0, 0, 1, 1], [], []>} : vector<9x8xbf16>, vector<8x8xbf16>, vector<9x8xf32> -> vector<9x8xf32>
    %cst_26 = arith.constant dense<0.000000e+00> : vector<9x8xf32>
    %37 = tpu.matmul %35, %1, %cst_26 {dimension_numbers = #tpu.dot_dimension_numbers<[1], [0], [0], [1], [0, 0, 1, 1], [], []>} : vector<9x8xbf16>, vector<8x8xbf16>, vector<9x8xf32> -> vector<9x8xf32>
    %cst_27 = arith.constant dense<0.000000e+00> : vector<9x8xf32>
    %38 = tpu.matmul %35, %2, %cst_27 {dimension_numbers = #tpu.dot_dimension_numbers<[1], [0], [0], [1], [0, 0, 1, 1], [], []>} : vector<9x8xbf16>, vector<8x8xbf16>, vector<9x8xf32> -> vector<9x8xf32>
    %cst_28 = arith.constant dense<0.000000e+00> : vector<9x8xf32>
    %39 = tpu.matmul %35, %3, %cst_28 {dimension_numbers = #tpu.dot_dimension_numbers<[1], [0], [0], [1], [0, 0, 1, 1], [], []>} : vector<9x8xbf16>, vector<8x8xbf16>, vector<9x8xf32> -> vector<9x8xf32>
    %40 = vector.extract_strided_slice %36 {offsets = [0, 0], sizes = [8, 8], strides = [1, 1]} : vector<9x8xf32> to vector<8x8xf32>
    %41 = vector.extract_strided_slice %38 {offsets = [1, 0], sizes = [8, 8], strides = [1, 1]} : vector<9x8xf32> to vector<8x8xf32>
    %42 = arith.addf %40, %41 : vector<8x8xf32>
    %c1_29 = arith.constant 1 : index
    %c0_30 = arith.constant 0 : index
    %c0_31 = arith.constant 0 : index
    %43 = vector.load %arg2[%c1_29, %c0_30, %c0_31] : memref<2x1x8xf32, #tpu.memory_space<vmem>>, vector<1x1x8xf32>
    %44 = vector.shape_cast %43 : vector<1x1x8xf32> to vector<1x8xf32>
    %45 = vector.broadcast %44 : vector<1x8xf32> to vector<8x8xf32>
    %46 = arith.addf %42, %45 : vector<8x8xf32>
    %47 = vector.extract_strided_slice %37 {offsets = [0, 0], sizes = [8, 8], strides = [1, 1]} : vector<9x8xf32> to vector<8x8xf32>
    %48 = vector.extract_strided_slice %39 {offsets = [1, 0], sizes = [8, 8], strides = [1, 1]} : vector<9x8xf32> to vector<8x8xf32>
    %49 = arith.addf %47, %48 : vector<8x8xf32>
    %c1_32 = arith.constant 1 : index
    %c0_33 = arith.constant 0 : index
    %c0_34 = arith.constant 0 : index
    %50 = vector.load %arg3[%c1_32, %c0_33, %c0_34] : memref<2x1x8xf32, #tpu.memory_space<vmem>>, vector<1x1x8xf32>
    %51 = vector.shape_cast %50 : vector<1x1x8xf32> to vector<1x8xf32>
    %52 = vector.broadcast %51 : vector<1x8xf32> to vector<8x8xf32>
    %53 = arith.addf %49, %52 : vector<8x8xf32>
    %54 = arith.negf %46 : vector<8x8xf32>
    %55 = math.exp %54 : vector<8x8xf32>
    %cst_35 = arith.constant 1.000000e+00 : f32
    %56 = vector.broadcast %cst_35 : f32 to vector<8x8xf32>
    %57 = arith.addf %56, %55 : vector<8x8xf32>
    %58 = arith.divf %56, %57 : vector<8x8xf32>
    %59 = math.tanh %53 : vector<8x8xf32>
    %60 = arith.mulf %58, %59 : vector<8x8xf32>
    %c1_36 = arith.constant 1 : index
    %c0_37 = arith.constant 0 : index
    %c0_38 = arith.constant 0 : index
    %61 = vector.load %arg8[%c1_36, %c0_37, %c0_38] : memref<2x8x8xf32, #tpu.memory_space<vmem>>, vector<1x8x8xf32>
    %62 = vector.shape_cast %61 : vector<1x8x8xf32> to vector<8x8xf32>
    %63 = vector.shape_cast %60 : vector<8x8xf32> to vector<1x8x8xf32>
    tpu.vector_store %arg8[%c1_36, %c0_37, %c0_38], %63 {strides = array<i32>} : memref<2x8x8xf32, #tpu.memory_space<vmem>>, vector<1x8x8xf32>,
    return
  }
  func.func @transform_0(%arg0: i32) -> (i32, i32, i32) {
    %c0_i32 = arith.constant 0 : i32
    %c0_i32_0 = arith.constant 0 : i32
    %c0_i32_1 = arith.constant 0 : i32
    return %arg0, %c0_i32, %c0_i32_0 : i32, i32, i32
  }
  func.func @transform_1(%arg0: i32) -> (i32, i32, i32) {
    %c0_i32 = arith.constant 0 : i32
    %c0_i32_0 = arith.constant 0 : i32
    %c0_i32_1 = arith.constant 0 : i32
    return %arg0, %c0_i32, %c0_i32_0 : i32, i32, i32
  }
  func.func @transform_2(%arg0: i32) -> (i32, i32, i32) {
    %c0_i32 = arith.constant 0 : i32
    %c0_i32_0 = arith.constant 0 : i32
    %c0_i32_1 = arith.constant 0 : i32
    return %arg0, %c0_i32, %c0_i32_0 : i32, i32, i32
  }
  func.func @transform_3(%arg0: i32) -> (i32, i32) {
    %c0_i32 = arith.constant 0 : i32
    %c0_i32_0 = arith.constant 0 : i32
    %c0_i32_1 = arith.constant 0 : i32
    return %c0_i32, %c0_i32_0 : i32, i32
  }
  func.func @transform_4(%arg0: i32) -> (i32, i32) {
    %c0_i32 = arith.constant 0 : i32
    %c0_i32_0 = arith.constant 0 : i32
    %c0_i32_1 = arith.constant 0 : i32
    return %c0_i32, %c0_i32_0 : i32, i32
  }
  func.func @transform_5(%arg0: i32) -> (i32, i32) {
    %c0_i32 = arith.constant 0 : i32
    %c0_i32_0 = arith.constant 0 : i32
    %c0_i32_1 = arith.constant 0 : i32
    return %c0_i32, %c0_i32_0 : i32, i32
  }
  func.func @transform_6(%arg0: i32) -> (i32, i32) {
    %c0_i32 = arith.constant 0 : i32
    %c0_i32_0 = arith.constant 0 : i32
    %c0_i32_1 = arith.constant 0 : i32
    return %c0_i32, %c0_i32_0 : i32, i32
  }
  func.func @transform_7(%arg0: i32) -> (i32, i32, i32) {
    %c0_i32 = arith.constant 0 : i32
    %c0_i32_0 = arith.constant 0 : i32
    %c0_i32_1 = arith.constant 0 : i32
    return %arg0, %c0_i32, %c0_i32_0 : i32, i32, i32
  }
}

</mosaic_0001>

<llo_original>
// kernel: tpu_custom_call.1
$region0: #{tpu_custom_call.1}
  #allocation0 [shape = 'u32[]', space=smem, size = 0x4, offset = 0x4, fixed_abs, tag = 'smem constant byte address 0x4 - core index']
  #allocation1 [shape = 'u32[144,128]{1,0:T(1,128)}', space=vmem, size = 0x12000, scoped, tag = 'internal scratch']
  %s0 = inlined_call_operand.hbm [shape: bf16[2,9,8], index: 0, kind: input, shape index: {}]
  %s1 = inlined_call_operand.hbm [shape: f32[2,1,8], index: 1, kind: input, shape index: {}]
  %s2 = inlined_call_operand.hbm [shape: f32[2,1,8], index: 2, kind: input, shape index: {}]
  %s3 = inlined_call_operand.hbm [shape: bf16[8,8], index: 3, kind: input, shape index: {}]
  %s4 = inlined_call_operand.hbm [shape: bf16[8,8], index: 4, kind: input, shape index: {}]
  %s5 = inlined_call_operand.hbm [shape: bf16[8,8], index: 5, kind: input, shape index: {}]
  %s6 = inlined_call_operand.hbm [shape: bf16[8,8], index: 6, kind: input, shape index: {}]
  %s7 = inlined_call_operand.hbm [shape: f32[2,8,8], index: 7, kind: output, shape index: {}]
  %s8 = sld [smem:[#allocation0]]
  $region66: #{tpu_custom_call.1} parent=0
    _
  %s10 = ssub.s32 1, %s8
  %s11 = scalar_select 0, %s10, %s8
  $region1: #{tpu_custom_call.1} parent=0
    #allocation2 [shape = 'u8[8192]{0}', space=vmem, size = 0x2000, scoped, tag = 'input window, operand 0, single buffered']
    #allocation3 [shape = 's32[1]{0}', space=sflag, size = 0x4, scoped, tag = 'scoped memory for tpu_custom_call.1']
    #allocation4 [shape = 's32[1]{0}', space=sflag, size = 0x4, scoped, tag = 'scoped memory for tpu_custom_call.1']
    #allocation5 [shape = 'u8[1024]{0}', space=vmem, size = 0x400, scoped, tag = 'input window, operand 1, single buffered']
    #allocation6 [shape = 's32[1]{0}', space=sflag, size = 0x4, scoped, tag = 'scoped memory for tpu_custom_call.1']
    #allocation7 [shape = 'u8[1024]{0}', space=vmem, size = 0x400, scoped, tag = 'input window, operand 2, single buffered']
    #allocation8 [shape = 'u8[2048]{0}', space=vmem, size = 0x800, scoped, tag = 'input window, operand 3, single buffered']
    #allocation9 [shape = 's32[1]{0}', space=sflag, size = 0x4, scoped, tag = 'scoped memory for tpu_custom_call.1']
    #allocation10 [shape = 'u8[2048]{0}', space=vmem, size = 0x800, scoped, tag = 'input window, operand 4, single buffered']
    #allocation11 [shape = 'u8[2048]{0}', space=vmem, size = 0x800, scoped, tag = 'input window, operand 5, single buffered']
    #allocation12 [shape = 's32[1]{0}', space=sflag, size = 0x4, scoped, tag = 'scoped memory for tpu_custom_call.1']
    #allocation13 [shape = 'u8[2048]{0}', space=vmem, size = 0x800, scoped, tag = 'input window, operand 6, single buffered']
    #allocation14 [shape = 'u8[8192]{0}', space=vmem, size = 0x2000, scoped, tag = 'output window, operand 0, single buffered']
    %12 = vsyncpa [#allocation3], 0
    %13 = vsyncpa [#allocation6], 0
    %14 = vsyncpa [#allocation9], 0
    %15 = vsyncpa [#allocation12], 0
    %16 = vsyncpa [#allocation4], 0
    // Predicated region
    $region2: #{tpu_custom_call.1} parent=1 // pred_check
      _
    $region3: #{tpu_custom_call.1} parent=1 // pred_check_branch
      %18 = sbr.rel (0) target = $region5
    $region4: #{tpu_custom_call.1} parent=1 // pred_region
      %s20 = ssub.s32 256, 256
      %21 = vsyncadd [#allocation3], %s20
      %s22 = sshll.u32 [#allocation2], 4
      %s23 = int_to_ptr.vmem [resolvable:$true] %s22
      %28 = dma.hbm_to_vmem [thread:$0]  %s0, 256, %s23, [#allocation3], 64, 64, 4
    $region5: #{tpu_custom_call.1} parent=1 // pred_fallthru
      _
    // Predicated region
    $region6: #{tpu_custom_call.1} parent=1 // pred_check
      _
    $region7: #{tpu_custom_call.1} parent=1 // pred_check_branch
      %30 = sbr.rel (0) target = $region9
    $region8: #{tpu_custom_call.1} parent=1 // pred_region
      %s32 = ssub.s32 32, 32
      %33 = vsyncadd [#allocation6], %s32
      %s34 = sshll.u32 [#allocation5], 4
      %s35 = int_to_ptr.vmem [resolvable:$true] %s34
      %40 = dma.hbm_to_vmem [thread:$0]  %s1, 32, %s35, [#allocation6], 16, 16, 1
    $region9: #{tpu_custom_call.1} parent=1 // pred_fallthru
      _
    // Predicated region
    $region10: #{tpu_custom_call.1} parent=1 // pred_check
      _
    $region11: #{tpu_custom_call.1} parent=1 // pred_check_branch
      %42 = sbr.rel (0) target = $region13
    $region12: #{tpu_custom_call.1} parent=1 // pred_region
      %s44 = ssub.s32 32, 32
      %45 = vsyncadd [#allocation6], %s44
      %s46 = sshll.u32 [#allocation7], 4
      %s47 = int_to_ptr.vmem [resolvable:$true] %s46
      %52 = dma.hbm_to_vmem [thread:$0]  %s2, 32, %s47, [#allocation6], 16, 16, 1
    $region13: #{tpu_custom_call.1} parent=1 // pred_fallthru
      _
    // Predicated region
    $region14: #{tpu_custom_call.1} parent=1 // pred_check
      _
    $region15: #{tpu_custom_call.1} parent=1 // pred_check_branch
      %54 = sbr.rel (0) target = $region17
    $region16: #{tpu_custom_call.1} parent=1 // pred_region
      %s56 = ssub.s32 64, 64
      %57 = vsyncadd [#allocation9], %s56
      %s59 = sshll.u32 [#allocation8], 4
      %s60 = int_to_ptr.vmem [resolvable:$true] %s59
      %62 = dma.hbm_to_vmem [thread:$0]  %s3, 64, %s60, [#allocation9]
    $region17: #{tpu_custom_call.1} parent=1 // pred_fallthru
      _
    // Predicated region
    $region18: #{tpu_custom_call.1} parent=1 // pred_check
      _
    $region19: #{tpu_custom_call.1} parent=1 // pred_check_branch
      %64 = sbr.rel (0) target = $region21
    $region20: #{tpu_custom_call.1} parent=1 // pred_region
      %s66 = ssub.s32 64, 64
      %67 = vsyncadd [#allocation9], %s66
      %s69 = sshll.u32 [#allocation10], 4
      %s70 = int_to_ptr.vmem [resolvable:$true] %s69
      %72 = dma.hbm_to_vmem [thread:$0]  %s4, 64, %s70, [#allocation9]
    $region21: #{tpu_custom_call.1} parent=1 // pred_fallthru
      _
    // Predicated region
    $region22: #{tpu_custom_call.1} parent=1 // pred_check
      _
    $region23: #{tpu_custom_call.1} parent=1 // pred_check_branch
      %74 = sbr.rel (0) target = $region25
    $region24: #{tpu_custom_call.1} parent=1 // pred_region
      %s76 = ssub.s32 64, 64
      %77 = vsyncadd [#allocation12], %s76
      %s79 = sshll.u32 [#allocation11], 4
      %s80 = int_to_ptr.vmem [resolvable:$true] %s79
      %82 = dma.hbm_to_vmem [thread:$0]  %s5, 64, %s80, [#allocation12]
    $region25: #{tpu_custom_call.1} parent=1 // pred_fallthru
      _
    // Predicated region
    $region26: #{tpu_custom_call.1} parent=1 // pred_check
      _
    $region27: #{tpu_custom_call.1} parent=1 // pred_check_branch
      %84 = sbr.rel (0) target = $region29
    $region28: #{tpu_custom_call.1} parent=1 // pred_region
      %s86 = ssub.s32 64, 64
      %87 = vsyncadd [#allocation12], %s86
      %s89 = sshll.u32 [#allocation13], 4
      %s90 = int_to_ptr.vmem [resolvable:$true] %s89
      %92 = dma.hbm_to_vmem [thread:$0]  %s6, 64, %s90, [#allocation12]
    $region29: #{tpu_custom_call.1} parent=1 // pred_fallthru
      _
    // Predicated region
    $region30: #{tpu_custom_call.1} parent=1 // pred_check
      _
    $region31: #{tpu_custom_call.1} parent=1 // pred_check_branch
      %94 = sbr.rel (0) target = $region33
    $region32: #{tpu_custom_call.1} parent=1 // pred_region
      %95 = dma.done [#allocation3], 256
    $region33: #{tpu_custom_call.1} parent=1 // pred_fallthru
      _
    // Predicated region
    $region34: #{tpu_custom_call.1} parent=1 // pred_check
      _
    $region35: #{tpu_custom_call.1} parent=1 // pred_check_branch
      %97 = sbr.rel (0) target = $region37
    $region36: #{tpu_custom_call.1} parent=1 // pred_region
      %98 = dma.done [#allocation6], 32
    $region37: #{tpu_custom_call.1} parent=1 // pred_fallthru
      _
    // Predicated region
    $region38: #{tpu_custom_call.1} parent=1 // pred_check
      _
    $region39: #{tpu_custom_call.1} parent=1 // pred_check_branch
      %100 = sbr.rel (0) target = $region41
    $region40: #{tpu_custom_call.1} parent=1 // pred_region
      %101 = dma.done [#allocation6], 32
    $region41: #{tpu_custom_call.1} parent=1 // pred_fallthru
      _
    // Predicated region
    $region42: #{tpu_custom_call.1} parent=1 // pred_check
      _
    $region43: #{tpu_custom_call.1} parent=1 // pred_check_branch
      %103 = sbr.rel (0) target = $region45
    $region44: #{tpu_custom_call.1} parent=1 // pred_region
      %104 = dma.done [#allocation9], 64
    $region45: #{tpu_custom_call.1} parent=1 // pred_fallthru
      _
    // Predicated region
    $region46: #{tpu_custom_call.1} parent=1 // pred_check
      _
    $region47: #{tpu_custom_call.1} parent=1 // pred_check_branch
      %106 = sbr.rel (0) target = $region49
    $region48: #{tpu_custom_call.1} parent=1 // pred_region
      %107 = dma.done [#allocation9], 64
    $region49: #{tpu_custom_call.1} parent=1 // pred_fallthru
      _
    // Predicated region
    $region50: #{tpu_custom_call.1} parent=1 // pred_check
      _
    $region51: #{tpu_custom_call.1} parent=1 // pred_check_branch
      %109 = sbr.rel (0) target = $region53
    $region52: #{tpu_custom_call.1} parent=1 // pred_region
      %110 = dma.done [#allocation12], 64
    $region53: #{tpu_custom_call.1} parent=1 // pred_fallthru
      _
    // Predicated region
    $region54: #{tpu_custom_call.1} parent=1 // pred_check
      _
    $region55: #{tpu_custom_call.1} parent=1 // pred_check_branch
      %112 = sbr.rel (0) target = $region57
    $region56: #{tpu_custom_call.1} parent=1 // pred_region
      %113 = dma.done [#allocation12], 64
    $region57: #{tpu_custom_call.1} parent=1 // pred_fallthru
      _
    %v115 = vld [vmem:[#allocation8] sm:$0xf]
    %v116 = vld [vmem:[#allocation10] sm:$0xf]
    %v117 = vld [vmem:[#allocation11] sm:$0xf]
    %v118 = vld [vmem:[#allocation13] sm:$0xf]
    %v119 = vld [vmem:[#allocation2] sm:$0xf]
    %v120 = vld [vmem:[#allocation2 + $0x4] sm:$0x1]
    %v123 = vunpack.c.l.b16 %v119
    %v124 = vunpack.c.l.b16 %v120
    %v125 = vpack.c.b16 %v124, %v123
    %vm126 = vcmask 64512
    %v128 = vsel %vm126, %v125, 0
    %vm130 = vcmask 1043456
    %v132 = vsel %vm130, %v115, 0
    %134 = vmatprep.subr.bf16.mxu0 0
    %135 = vmatpush1.bf16.msra.mxu0 %v132
    %136 = vmatprep.subr.bf16.mxu0 0
    %137 = vmatpush1.bf16.msra.mxu0 0
    %138 = vmatprep.subr.bf16.mxu0 0
    %139 = vmatpush1.bf16.msra.mxu0 0
    %140 = vmatprep.subr.bf16.mxu0 0
    %141 = vmatpush1.bf16.msra.mxu0 0
    %142 = vmatprep.subr.bf16.mxu0 0
    %143 = vmatpush1.bf16.msra.mxu0 0
    %144 = vmatprep.subr.bf16.mxu0 0
    %145 = vmatpush1.bf16.msra.mxu0 0
    %146 = vmatprep.subr.bf16.mxu0 0
    %147 = vmatpush1.bf16.msra.mxu0 0
    %148 = vmatprep.subr.bf16.mxu0 0
    %149 = vmatpush1.bf16.msra.mxu0 0
    %150 = vmatprep.subr.bf16.mxu0 0
    %151 = vmatpush1.bf16.msra.mxu0 0
    %152 = vmatprep.subr.bf16.mxu0 0
    %153 = vmatpush1.bf16.msra.mxu0 0
    %154 = vmatprep.subr.bf16.mxu0 0
    %155 = vmatpush1.bf16.msra.mxu0 0
    %156 = vmatprep.subr.bf16.mxu0 0
    %157 = vmatpush1.bf16.msra.mxu0 0
    %158 = vmatprep.subr.bf16.mxu0 0
    %159 = vmatpush1.bf16.msra.mxu0 0
    %160 = vmatprep.subr.bf16.mxu0 0
    %161 = vmatpush1.bf16.msra.mxu0 0
    %162 = vmatprep.subr.bf16.mxu0 0
    %163 = vmatpush1.bf16.msra.mxu0 0
    %164 = vmatprep.subr.bf16.mxu0 0
    %165 = vmatpush1.bf16.msra.mxu0 0
    %166 = vmatprep.mubr.bf16.mxu0 0
    %167 = vmatmul.mubr.bf16.gmra.mrb[0].mxu0 %v128
    %v168 = vpop.f32.mrb[0].mxu0
    %v169 = vadd.f32 0.0, %v168
    %v170 = vpop.f32.mrb[0].mxu0
    %v171 = vpop.f32.mrb[0].mxu0
    %v172 = vpop.f32.mrb[0].mxu0
    %173 = vdwg.mxu0
    %v175 = vsel %vm130, %v116, 0
    %177 = vmatprep.subr.bf16.mxu0 0
    %178 = vmatpush1.bf16.msra.mxu0 %v175
    %179 = vmatprep.subr.bf16.mxu0 0
    %180 = vmatpush1.bf16.msra.mxu0 0
    %181 = vmatprep.subr.bf16.mxu0 0
    %182 = vmatpush1.bf16.msra.mxu0 0
    %183 = vmatprep.subr.bf16.mxu0 0
    %184 = vmatpush1.bf16.msra.mxu0 0
    %185 = vmatprep.subr.bf16.mxu0 0
    %186 = vmatpush1.bf16.msra.mxu0 0
    %187 = vmatprep.subr.bf16.mxu0 0
    %188 = vmatpush1.bf16.msra.mxu0 0
    %189 = vmatprep.subr.bf16.mxu0 0
    %190 = vmatpush1.bf16.msra.mxu0 0
    %191 = vmatprep.subr.bf16.mxu0 0
    %192 = vmatpush1.bf16.msra.mxu0 0
    %193 = vmatprep.subr.bf16.mxu0 0
    %194 = vmatpush1.bf16.msra.mxu0 0
    %195 = vmatprep.subr.bf16.mxu0 0
    %196 = vmatpush1.bf16.msra.mxu0 0
    %197 = vmatprep.subr.bf16.mxu0 0
    %198 = vmatpush1.bf16.msra.mxu0 0
    %199 = vmatprep.subr.bf16.mxu0 0
    %200 = vmatpush1.bf16.msra.mxu0 0
    %201 = vmatprep.subr.bf16.mxu0 0
    %202 = vmatpush1.bf16.msra.mxu0 0
    %203 = vmatprep.subr.bf16.mxu0 0
    %204 = vmatpush1.bf16.msra.mxu0 0
    %205 = vmatprep.subr.bf16.mxu0 0
    %206 = vmatpush1.bf16.msra.mxu0 0
    %207 = vmatprep.subr.bf16.mxu0 0
    %208 = vmatpush1.bf16.msra.mxu0 0
    %209 = vmatprep.mubr.bf16.mxu0 0
    %210 = vmatmul.mubr.bf16.gmra.mrb[0].mxu0 %v128
    %v211 = vpop.f32.mrb[0].mxu0
    %v212 = vadd.f32 0.0, %v211
    %v213 = vpop.f32.mrb[0].mxu0
    %v214 = vpop.f32.mrb[0].mxu0
    %v215 = vpop.f32.mrb[0].mxu0
    %216 = vdwg.mxu0
    %v218 = vsel %vm130, %v117, 0
    %220 = vmatprep.subr.bf16.mxu0 0
    %221 = vmatpush1.bf16.msra.mxu0 %v218
    %222 = vmatprep.subr.bf16.mxu0 0
    %223 = vmatpush1.bf16.msra.mxu0 0
    %224 = vmatprep.subr.bf16.mxu0 0
    %225 = vmatpush1.bf16.msra.mxu0 0
    %226 = vmatprep.subr.bf16.mxu0 0
    %227 = vmatpush1.bf16.msra.mxu0 0
    %228 = vmatprep.subr.bf16.mxu0 0
    %229 = vmatpush1.bf16.msra.mxu0 0
    %230 = vmatprep.subr.bf16.mxu0 0
    %231 = vmatpush1.bf16.msra.mxu0 0
    %232 = vmatprep.subr.bf16.mxu0 0
    %233 = vmatpush1.bf16.msra.mxu0 0
    %234 = vmatprep.subr.bf16.mxu0 0
    %235 = vmatpush1.bf16.msra.mxu0 0
    %236 = vmatprep.subr.bf16.mxu0 0
    %237 = vmatpush1.bf16.msra.mxu0 0
    %238 = vmatprep.subr.bf16.mxu0 0
    %239 = vmatpush1.bf16.msra.mxu0 0
    %240 = vmatprep.subr.bf16.mxu0 0
    %241 = vmatpush1.bf16.msra.mxu0 0
    %242 = vmatprep.subr.bf16.mxu0 0
    %243 = vmatpush1.bf16.msra.mxu0 0
    %244 = vmatprep.subr.bf16.mxu0 0
    %245 = vmatpush1.bf16.msra.mxu0 0
    %246 = vmatprep.subr.bf16.mxu0 0
    %247 = vmatpush1.bf16.msra.mxu0 0
    %248 = vmatprep.subr.bf16.mxu0 0
    %249 = vmatpush1.bf16.msra.mxu0 0
    %250 = vmatprep.subr.bf16.mxu0 0
    %251 = vmatpush1.bf16.msra.mxu0 0
    %252 = vmatprep.mubr.bf16.mxu0 0
    %253 = vmatmul.mubr.bf16.gmra.mrb[0].mxu0 %v128
    %v254 = vpop.f32.mrb[0].mxu0
    %v255 = vadd.f32 0.0, %v254
    %v256 = vpop.f32.mrb[0].mxu0
    %v257 = vpop.f32.mrb[0].mxu0
    %v258 = vadd.f32 0.0, %v257
    %v259 = vpop.f32.mrb[0].mxu0
    %260 = vdwg.mxu0
    %v262 = vsel %vm130, %v118, 0
    %264 = vmatprep.subr.bf16.mxu0 0
    %265 = vmatpush1.bf16.msra.mxu0 %v262
    %266 = vmatprep.subr.bf16.mxu0 0
    %267 = vmatpush1.bf16.msra.mxu0 0
    %268 = vmatprep.subr.bf16.mxu0 0
    %269 = vmatpush1.bf16.msra.mxu0 0
    %270 = vmatprep.subr.bf16.mxu0 0
    %271 = vmatpush1.bf16.msra.mxu0 0
    %272 = vmatprep.subr.bf16.mxu0 0
    %273 = vmatpush1.bf16.msra.mxu0 0
    %274 = vmatprep.subr.bf16.mxu0 0
    %275 = vmatpush1.bf16.msra.mxu0 0
    %276 = vmatprep.subr.bf16.mxu0 0
    %277 = vmatpush1.bf16.msra.mxu0 0
    %278 = vmatprep.subr.bf16.mxu0 0
    %279 = vmatpush1.bf16.msra.mxu0 0
    %280 = vmatprep.subr.bf16.mxu0 0
    %281 = vmatpush1.bf16.msra.mxu0 0
    %282 = vmatprep.subr.bf16.mxu0 0
    %283 = vmatpush1.bf16.msra.mxu0 0
    %284 = vmatprep.subr.bf16.mxu0 0
    %285 = vmatpush1.bf16.msra.mxu0 0
    %286 = vmatprep.subr.bf16.mxu0 0
    %287 = vmatpush1.bf16.msra.mxu0 0
    %288 = vmatprep.subr.bf16.mxu0 0
    %289 = vmatpush1.bf16.msra.mxu0 0
    %290 = vmatprep.subr.bf16.mxu0 0
    %291 = vmatpush1.bf16.msra.mxu0 0
    %292 = vmatprep.subr.bf16.mxu0 0
    %293 = vmatpush1.bf16.msra.mxu0 0
    %294 = vmatprep.subr.bf16.mxu0 0
    %295 = vmatpush1.bf16.msra.mxu0 0
    %296 = vmatprep.mubr.bf16.mxu0 0
    %297 = vmatmul.mubr.bf16.gmra.mrb[0].mxu0 %v128
    %v298 = vpop.f32.mrb[0].mxu0
    %v299 = vadd.f32 0.0, %v298
    %v300 = vpop.f32.mrb[0].mxu0
    %v301 = vpop.f32.mrb[0].mxu0
    %v302 = vadd.f32 0.0, %v301
    %v303 = vpop.f32.mrb[0].mxu0
    %304 = vdwg.mxu0
    %vm307 = vcmask 1046528
    %v308 = vrot.slane %v255, 1
    %v309 = vrot.slane %v258, 1
    %v310 = vsel %vm307, %v308, %v309
    %v312 = vadd.f32 %v169, %v310
    %v313 = vld [vmem:[#allocation5] sm:$0x1]
    %v315 = vlaneseq
    %v316 = vshrl.u32 %v315, 7
    %v317 = vsub.s32 0, %v316
    %v318 = vrot.slane %v313, %v317
    %v320 = vadd.f32 %v312, %v318
    %v323 = vrot.slane %v299, 1
    %v324 = vrot.slane %v302, 1
    %v325 = vsel %vm307, %v323, %v324
    %v327 = vadd.f32 %v212, %v325
    %v328 = vld [vmem:[#allocation7] sm:$0x1]
    %v330 = vlaneseq
    %v331 = vshrl.u32 %v330, 7
    %v332 = vsub.s32 0, %v331
    %v333 = vrot.slane %v328, %v332
    %v335 = vadd.f32 %v327, %v333
    %v336 = vxor.u32 %v320, 2147483648
    %v337 = vmul.f32 %v336, 1.442695
    %v338 = vpow.pop %v337
    %v339 = vadd.f32 %v338, 1.0
    %v340 = vrcp.pop %v339
    %v341 = vmul.f32 1.0, %v340
    %v342 = vtanh.pop %v335
    %v343 = vmul.f32 %v341, %v342
    %344 = vst.msk [vmem:[#allocation14] sm:$0xff] %vm126, %v343
    %s345 = scalar_lea.vmem [#allocation2], 8
    %v346 = vld [vmem:[%s345] sm:$0xf]
    %v347 = vld [vmem:[%s345 + $0x4] sm:$0x1]
    %v350 = vunpack.c.l.b16 %v346
    %v351 = vunpack.c.l.b16 %v347
    %v352 = vpack.c.b16 %v351, %v350
    %v354 = vsel %vm126, %v352, 0
    %356 = vmatprep.subr.bf16.mxu0 0
    %357 = vmatpush1.bf16.msra.mxu0 %v132
    %358 = vmatprep.subr.bf16.mxu0 0
    %359 = vmatpush1.bf16.msra.mxu0 0
    %360 = vmatprep.subr.bf16.mxu0 0
    %361 = vmatpush1.bf16.msra.mxu0 0
    %362 = vmatprep.subr.bf16.mxu0 0
    %363 = vmatpush1.bf16.msra.mxu0 0
    %364 = vmatprep.subr.bf16.mxu0 0
    %365 = vmatpush1.bf16.msra.mxu0 0
    %366 = vmatprep.subr.bf16.mxu0 0
    %367 = vmatpush1.bf16.msra.mxu0 0
    %368 = vmatprep.subr.bf16.mxu0 0
    %369 = vmatpush1.bf16.msra.mxu0 0
    %370 = vmatprep.subr.bf16.mxu0 0
    %371 = vmatpush1.bf16.msra.mxu0 0
    %372 = vmatprep.subr.bf16.mxu0 0
    %373 = vmatpush1.bf16.msra.mxu0 0
    %374 = vmatprep.subr.bf16.mxu0 0
    %375 = vmatpush1.bf16.msra.mxu0 0
    %376 = vmatprep.subr.bf16.mxu0 0
    %377 = vmatpush1.bf16.msra.mxu0 0
    %378 = vmatprep.subr.bf16.mxu0 0
    %379 = vmatpush1.bf16.msra.mxu0 0
    %380 = vmatprep.subr.bf16.mxu0 0
    %381 = vmatpush1.bf16.msra.mxu0 0
    %382 = vmatprep.subr.bf16.mxu0 0
    %383 = vmatpush1.bf16.msra.mxu0 0
    %384 = vmatprep.subr.bf16.mxu0 0
    %385 = vmatpush1.bf16.msra.mxu0 0
    %386 = vmatprep.subr.bf16.mxu0 0
    %387 = vmatpush1.bf16.msra.mxu0 0
    %388 = vmatprep.mubr.bf16.mxu0 0
    %389 = vmatmul.mubr.bf16.gmra.mrb[0].mxu0 %v354
    %v390 = vpop.f32.mrb[0].mxu0
    %v391 = vadd.f32 0.0, %v390
    %v392 = vpop.f32.mrb[0].mxu0
    %v393 = vpop.f32.mrb[0].mxu0
    %v394 = vpop.f32.mrb[0].mxu0
    %395 = vdwg.mxu0
    %396 = vmatprep.subr.bf16.mxu0 0
    %397 = vmatpush1.bf16.msra.mxu0 %v175
    %398 = vmatprep.subr.bf16.mxu0 0
    %399 = vmatpush1.bf16.msra.mxu0 0
    %400 = vmatprep.subr.bf16.mxu0 0
    %401 = vmatpush1.bf16.msra.mxu0 0
    %402 = vmatprep.subr.bf16.mxu0 0
    %403 = vmatpush1.bf16.msra.mxu0 0
    %404 = vmatprep.subr.bf16.mxu0 0
    %405 = vmatpush1.bf16.msra.mxu0 0
    %406 = vmatprep.subr.bf16.mxu0 0
    %407 = vmatpush1.bf16.msra.mxu0 0
    %408 = vmatprep.subr.bf16.mxu0 0
    %409 = vmatpush1.bf16.msra.mxu0 0
    %410 = vmatprep.subr.bf16.mxu0 0
    %411 = vmatpush1.bf16.msra.mxu0 0
    %412 = vmatprep.subr.bf16.mxu0 0
    %413 = vmatpush1.bf16.msra.mxu0 0
    %414 = vmatprep.subr.bf16.mxu0 0
    %415 = vmatpush1.bf16.msra.mxu0 0
    %416 = vmatprep.subr.bf16.mxu0 0
    %417 = vmatpush1.bf16.msra.mxu0 0
    %418 = vmatprep.subr.bf16.mxu0 0
    %419 = vmatpush1.bf16.msra.mxu0 0
    %420 = vmatprep.subr.bf16.mxu0 0
    %421 = vmatpush1.bf16.msra.mxu0 0
    %422 = vmatprep.subr.bf16.mxu0 0
    %423 = vmatpush1.bf16.msra.mxu0 0
    %424 = vmatprep.subr.bf16.mxu0 0
    %425 = vmatpush1.bf16.msra.mxu0 0
    %426 = vmatprep.subr.bf16.mxu0 0
    %427 = vmatpush1.bf16.msra.mxu0 0
    %428 = vmatprep.mubr.bf16.mxu0 0
    %429 = vmatmul.mubr.bf16.gmra.mrb[0].mxu0 %v354
    %v430 = vpop.f32.mrb[0].mxu0
    %v431 = vadd.f32 0.0, %v430
    %v432 = vpop.f32.mrb[0].mxu0
    %v433 = vpop.f32.mrb[0].mxu0
    %v434 = vpop.f32.mrb[0].mxu0
    %435 = vdwg.mxu0
    %436 = vmatprep.subr.bf16.mxu0 0
    %437 = vmatpush1.bf16.msra.mxu0 %v218
    %438 = vmatprep.subr.bf16.mxu0 0
    %439 = vmatpush1.bf16.msra.mxu0 0
    %440 = vmatprep.subr.bf16.mxu0 0
    %441 = vmatpush1.bf16.msra.mxu0 0
    %442 = vmatprep.subr.bf16.mxu0 0
    %443 = vmatpush1.bf16.msra.mxu0 0
    %444 = vmatprep.subr.bf16.mxu0 0
    %445 = vmatpush1.bf16.msra.mxu0 0
    %446 = vmatprep.subr.bf16.mxu0 0
    %447 = vmatpush1.bf16.msra.mxu0 0
    %448 = vmatprep.subr.bf16.mxu0 0
    %449 = vmatpush1.bf16.msra.mxu0 0
    %450 = vmatprep.subr.bf16.mxu0 0
    %451 = vmatpush1.bf16.msra.mxu0 0
    %452 = vmatprep.subr.bf16.mxu0 0
    %453 = vmatpush1.bf16.msra.mxu0 0
    %454 = vmatprep.subr.bf16.mxu0 0
    %455 = vmatpush1.bf16.msra.mxu0 0
    %456 = vmatprep.subr.bf16.mxu0 0
    %457 = vmatpush1.bf16.msra.mxu0 0
    %458 = vmatprep.subr.bf16.mxu0 0
    %459 = vmatpush1.bf16.msra.mxu0 0
    %460 = vmatprep.subr.bf16.mxu0 0
    %461 = vmatpush1.bf16.msra.mxu0 0
    %462 = vmatprep.subr.bf16.mxu0 0
    %463 = vmatpush1.bf16.msra.mxu0 0
    %464 = vmatprep.subr.bf16.mxu0 0
    %465 = vmatpush1.bf16.msra.mxu0 0
    %466 = vmatprep.subr.bf16.mxu0 0
    %467 = vmatpush1.bf16.msra.mxu0 0
    %468 = vmatprep.mubr.bf16.mxu0 0
    %469 = vmatmul.mubr.bf16.gmra.mrb[0].mxu0 %v354
    %v470 = vpop.f32.mrb[0].mxu0
    %v471 = vadd.f32 0.0, %v470
    %v472 = vpop.f32.mrb[0].mxu0
    %v473 = vpop.f32.mrb[0].mxu0
    %v474 = vadd.f32 0.0, %v473
    %v475 = vpop.f32.mrb[0].mxu0
    %476 = vdwg.mxu0
    %477 = vmatprep.subr.bf16.mxu0 0
    %478 = vmatpush1.bf16.msra.mxu0 %v262
    %479 = vmatprep.subr.bf16.mxu0 0
    %480 = vmatpush1.bf16.msra.mxu0 0
    %481 = vmatprep.subr.bf16.mxu0 0
    %482 = vmatpush1.bf16.msra.mxu0 0
    %483 = vmatprep.subr.bf16.mxu0 0
    %484 = vmatpush1.bf16.msra.mxu0 0
    %485 = vmatprep.subr.bf16.mxu0 0
    %486 = vmatpush1.bf16.msra.mxu0 0
    %487 = vmatprep.subr.bf16.mxu0 0
    %488 = vmatpush1.bf16.msra.mxu0 0
    %489 = vmatprep.subr.bf16.mxu0 0
    %490 = vmatpush1.bf16.msra.mxu0 0
    %491 = vmatprep.subr.bf16.mxu0 0
    %492 = vmatpush1.bf16.msra.mxu0 0
    %493 = vmatprep.subr.bf16.mxu0 0
    %494 = vmatpush1.bf16.msra.mxu0 0
    %495 = vmatprep.subr.bf16.mxu0 0
    %496 = vmatpush1.bf16.msra.mxu0 0
    %497 = vmatprep.subr.bf16.mxu0 0
    %498 = vmatpush1.bf16.msra.mxu0 0
    %499 = vmatprep.subr.bf16.mxu0 0
    %500 = vmatpush1.bf16.msra.mxu0 0
    %501 = vmatprep.subr.bf16.mxu0 0
    %502 = vmatpush1.bf16.msra.mxu0 0
    %503 = vmatprep.subr.bf16.mxu0 0
    %504 = vmatpush1.bf16.msra.mxu0 0
    %505 = vmatprep.subr.bf16.mxu0 0
    %506 = vmatpush1.bf16.msra.mxu0 0
    %507 = vmatprep.subr.bf16.mxu0 0
    %508 = vmatpush1.bf16.msra.mxu0 0
    %509 = vmatprep.mubr.bf16.mxu0 0
    %510 = vmatmul.mubr.bf16.gmra.mrb[0].mxu0 %v354
    %v511 = vpop.f32.mrb[0].mxu0
    %v512 = vadd.f32 0.0, %v511
    %v513 = vpop.f32.mrb[0].mxu0
    %v514 = vpop.f32.mrb[0].mxu0
    %v515 = vadd.f32 0.0, %v514
    %v516 = vpop.f32.mrb[0].mxu0
    %517 = vdwg.mxu0
    %v520 = vrot.slane %v471, 1
    %v521 = vrot.slane %v474, 1
    %v522 = vsel %vm307, %v520, %v521
    %v524 = vadd.f32 %v391, %v522
    %s525 = scalar_lea.vmem [#allocation5], 1
    %v526 = vld [vmem:[%s525] sm:$0x1]
    %v528 = vlaneseq
    %v529 = vshrl.u32 %v528, 7
    %v530 = vsub.s32 0, %v529
    %v531 = vrot.slane %v526, %v530
    %v533 = vadd.f32 %v524, %v531
    %v536 = vrot.slane %v512, 1
    %v537 = vrot.slane %v515, 1
    %v538 = vsel %vm307, %v536, %v537
    %v540 = vadd.f32 %v431, %v538
    %s541 = scalar_lea.vmem [#allocation7], 1
    %v542 = vld [vmem:[%s541] sm:$0x1]
    %v544 = vlaneseq
    %v545 = vshrl.u32 %v544, 7
    %v546 = vsub.s32 0, %v545
    %v547 = vrot.slane %v542, %v546
    %v549 = vadd.f32 %v540, %v547
    %v550 = vxor.u32 %v533, 2147483648
    %v551 = vmul.f32 %v550, 1.442695
    %v552 = vpow.pop %v551
    %v553 = vadd.f32 %v552, 1.0
    %v554 = vrcp.pop %v553
    %v555 = vmul.f32 1.0, %v554
    %v556 = vtanh.pop %v549
    %v557 = vmul.f32 %v555, %v556
    %s558 = scalar_lea.vmem [#allocation14], 8
    %559 = vst.msk [vmem:[%s558] sm:$0xff] %vm126, %v557
    // Predicated region
    $region58: #{tpu_custom_call.1} parent=1 // pred_check
      _
    $region59: #{tpu_custom_call.1} parent=1 // pred_check_branch
      %561 = sbr.rel (0) target = $region61
    $region60: #{tpu_custom_call.1} parent=1 // pred_region
      %s563 = ssub.s32 256, 256
      %564 = vsyncadd [#allocation4], %s563
      %s565 = sshll.u32 [#allocation14], 4
      %s566 = int_to_ptr.vmem [resolvable:$true] %s565
      %571 = dma.vmem_to_hbm [thread:$0]  %s566, 256, %s7, [#allocation4], 128, 128, 8
    $region61: #{tpu_custom_call.1} parent=1 // pred_fallthru
      _
    // Predicated region
    $region62: #{tpu_custom_call.1} parent=1 // pred_check
      _
    $region63: #{tpu_custom_call.1} parent=1 // pred_check_branch
      %573 = sbr.rel (0) target = $region65
    $region64: #{tpu_custom_call.1} parent=1 // pred_region
      %574 = dma.done [#allocation4], 256
    $region65: #{tpu_custom_call.1} parent=1 // pred_fallthru
      _
    %575 = vsyncpa [#allocation3], 1
    %576 = vsyncpa [#allocation6], 1
    %577 = vsyncpa [#allocation9], 1
    %578 = vsyncpa [#allocation12], 1
    %579 = vsyncpa [#allocation4], 1

</llo_original>
